<compile_context>
chip_gen: v7x
topology: tpu7x:2x2x1
jax: 0.10.0
libtpu: 0.0.40
codegen_flags: <defaults>
</compile_context>

<pallas_src>
import jax
import jax.numpy as jnp
import numpy as np
from jax import lax
from jax.experimental import pallas as pl
from jax.experimental.pallas import tpu as pltpu

N_HEADS = 4  # fixed by the module: nn.MultiheadAttention(..., num_heads=4)


# --------------------------------------------------------------------------- helpers
def _round_up(x, m):
    return (x + m - 1) // m * m


def _layernorm(x, g, b, eps=1e-5):
    mu = jnp.mean(x, axis=-1, keepdims=True)
    var = jnp.mean((x - mu) ** 2, axis=-1, keepdims=True)
    return (x - mu) * lax.rsqrt(var + eps) * g + b


def _l2norm(x, eps=1e-12):
    # F.normalize(dim=-1): x / max(||x||, eps) == x * rsqrt(max(||x||^2, eps^2))
    n2 = jnp.sum(x * x, axis=-1, keepdims=True)
    return x * lax.rsqrt(jnp.maximum(n2, eps * eps))


def _sigmoid(x):
    # explicit exp + divide (exact; avoids relying on a logistic lowering / approx recip)
    return 1.0 / (1.0 + jnp.exp(-x))


# --------------------------------------------------------------------------- kernels
def _normalize_targets_kernel(tgt_ref, out_ref):
    # F.normalize(target_features, dim=-1), computed once per target row, stored bf16.
    out_ref[...] = _l2norm(tgt_ref[...]).astype(jnp.bfloat16)


def _combine_features_kernel(img_ref, txt_ref,
                             wtxt_ref, btxt_ref, wimg_ref, bimg_ref,
                             ln1g_ref, ln1b_ref,
                             wq_ref, bq_ref, wk_ref, wv_ref, bv_ref,
                             wao_ref, bao_ref, hmask_ref,
                             wca_ref, wcc_ref, bc_ref, ln2g_ref, ln2b_ref,
                             wd2_ref, bd2_ref, wout_ref, bout_ref, scale_ref,
                             pred_ref):
    f32, bf16 = jnp.float32, jnp.bfloat16
    img = img_ref[...]                                   # (TB, D) f32
    txt = txt_ref[...]                                   # (TB, D) f32
    ln1g, ln1b = ln1g_ref[...], ln1b_ref[...]

    # Linear -> ReLU -> Dropout(eval) -> LayerNorm1 for both projections.
    tp = _layernorm(jnp.maximum(
        jnp.dot(txt.astype(bf16), wtxt_ref[...], preferred_element_type=f32)
        + btxt_ref[...], 0.0), ln1g, ln1b)
    ip = _layernorm(jnp.maximum(
        jnp.dot(img.astype(bf16), wimg_ref[...], preferred_element_type=f32)
        + bimg_ref[...], 0.0), ln1g, ln1b)

    P = tp.shape[-1]
    inv_sqrt_hd = 1.0 / float(P // N_HEADS) ** 0.5

    tpb = tp.astype(bf16)
    ipb = ip.astype(bf16)
    dxb = (ip - tp).astype(bf16)                         # (image - text) projected diff

    # Attention over the 2-token sequence [text_proj, image_proj] (batch_first).
    # k / v biases cancel in the (token1 - token0) differences used below.
    q_t = jnp.dot(tpb, wq_ref[...], preferred_element_type=f32) + bq_ref[...]
    q_i = jnp.dot(ipb, wq_ref[...], preferred_element_type=f32) + bq_ref[...]
    kd = jnp.dot(dxb, wk_ref[...], preferred_element_type=f32)          # k1 - k0
    v_t = jnp.dot(tpb, wv_ref[...], preferred_element_type=f32) + bv_ref[...]
    vd = jnp.dot(dxb, wv_ref[...], preferred_element_type=f32)          # v1 - v0

    # Per-head score differences, already broadcast across each head's lanes, via one
    # matmul with the block-diagonal "same-head" mask (no sub-128-lane slicing).
    d0 = jnp.dot((q_t * kd).astype(bf16), hmask_ref[...],
                 preferred_element_type=f32) * inv_sqrt_hd              # s01 - s00
    d1 = jnp.dot((q_i * kd).astype(bf16), hmask_ref[...],
                 preferred_element_type=f32) * inv_sqrt_hd              # s11 - s10
    # softmax over 2 tokens: a01 = sigmoid(s01 - s00), a11 = sigmoid(s11 - s10).
    w = _sigmoid(d0) + _sigmoid(d1)
    o_sum = 2.0 * v_t + w * vd                           # attn_out(tok0) + attn_out(tok1)
    # mean over the 2 positions folded through the (linear) out_proj.
    attn_mean = (jnp.dot((0.5 * o_sum).astype(bf16), wao_ref[...],
                         preferred_element_type=f32) + bao_ref[...])    # (TB, P)

    # Fused combiner_layer + dynamic_scalar[0]: two accumulating matmuls on the
    # (attn_mean, image_proj) halves instead of a (TB, 2P) concatenation.
    ch = (jnp.dot(attn_mean.astype(bf16), wca_ref[...], preferred_element_type=f32)
          + jnp.dot(ipb, wcc_ref[...], preferred_element_type=f32)
          + bc_ref[...])                                 # (TB, 2H)
    Hh = ch.shape[-1] // 2
    comb = _layernorm(jnp.maximum(ch[:, :Hh], 0.0), ln2g_ref[...], ln2b_ref[...])
    h1 = jnp.maximum(ch[:, Hh:], 0.0)

    # dynamic_scalar tail: width-1 Linear done as a VPU multiply + row reduction.
    ds = _sigmoid(jnp.sum(h1 * wd2_ref[...], axis=-1, keepdims=True) + bd2_ref[...])

    out = (jnp.dot(comb.astype(bf16), wout_ref[...], preferred_element_type=f32)
           + bout_ref[...] + ds * txt + (1.0 - ds) * img)               # (TB, D)
    # exp(logit_scale) folded into the predicted features once per batch row.
    pred_ref[...] = (jnp.exp(scale_ref[...]) * _l2norm(out)).astype(bf16)


def _logits_kernel(pred_ref, tgt_t_ref, out_ref):
    # (bb, D) bf16 @ (D, bt) bf16 -> (bb, bt) f32; scale already folded into pred.
    out_ref[...] = jnp.dot(pred_ref[...], tgt_t_ref[...],
                           preferred_element_type=jnp.float32)


# --------------------------------------------------------------------------- wrapper
def combiner_forward(image, text, target, params, *,
                     block_b=128, block_t=512,
                     vmem_limit_bytes=48 * 1024 * 1024):
    f32 = jnp.float32
    image = jnp.asarray(image, f32)
    text = jnp.asarray(text, f32)
    target = jnp.asarray(target, f32)
    B, D = image.shape
    T, Dt = target.shape
    assert Dt == D and text.shape == (B, D)
    P = params['w_q'].shape[0]
    HD = P // N_HEADS

    # Tile sizes: batch tiles in sublane multiples, target tiles in lane multiples.
    bb = min(block_b, _round_up(B, 8))
    bt = min(block_t, _round_up(T, 128))
    Bp, Tp = _round_up(B, bb), _round_up(T, bt)
    if Bp != B:
        image = jnp.pad(image, ((0, Bp - B), (0, 0)))
        text = jnp.pad(text, ((0, Bp - B), (0, 0)))
    if Tp != T:
        target = jnp.pad(target, ((0, Tp - T), (0, 0)))

    def cparams(sem):
        return pltpu.CompilerParams(dimension_semantics=sem,
                                    vmem_limit_bytes=vmem_limit_bytes)

    # ---- kernel 1: normalize targets once (f32 math, bf16 out) ----
    tgt_norm = pl.pallas_call(
        _normalize_targets_kernel,
        out_shape=jax.ShapeDtypeStruct((Tp, D), jnp.bfloat16),
        grid=(Tp // bt,),
        in_specs=[pl.BlockSpec((bt, D), lambda i: (i, 0))],
        out_specs=pl.BlockSpec((bt, D), lambda i: (i, 0)),
        compiler_params=cparams(("parallel",)),
    )(target)
    # One-time (T, D) -> (D, T) layout change in XLA so the steady-state logits loop is a
    # plain (K, N) contraction with no per-step transpose.
    tgt_norm_t = tgt_norm.T                              # (D, Tp) bf16

    # Block-diagonal "same head" mask used to broadcast per-head score sums.
    lane = jnp.arange(P)
    head_mask = (lane[:, None] // HD == lane[None, :] // HD).astype(jnp.bfloat16)

    weights = (params['w_txt'], params['b_txt'], params['w_img'], params['b_img'],
               params['ln1_g'], params['ln1_b'],
               params['w_q'], params['b_q'], params['w_k'], params['w_v'], params['b_v'],
               params['w_ao'], params['b_ao'], head_mask,
               params['w_comb_a'], params['w_comb_i'], params['b_comb'],
               params['ln2_g'], params['ln2_b'],
               params['w_ds2'], params['b_ds2'],
               params['w_out'], params['b_out'], params['logit_scale'])

    def resident(shape):
        # Full-array block, constant index map (fetched once, stays VMEM-resident),
        # single-buffered since it never changes across the grid.
        imap = lambda i: (0, 0)
        buffered = getattr(pl, "Buffered", None)
        if buffered is not None:
            try:
                return pl.BlockSpec(shape, imap, pipeline_mode=buffered(1))
            except TypeError:
                pass
        return pl.BlockSpec(shape, imap)

    # ---- kernel 2: combine_features per batch tile (weights VMEM-resident) ----
    pred = pl.pallas_call(
        _combine_features_kernel,
        out_shape=jax.ShapeDtypeStruct((Bp, D), jnp.bfloat16),
        grid=(Bp // bb,),
        in_specs=([pl.BlockSpec((bb, D), lambda i: (i, 0)),      # image
                   pl.BlockSpec((bb, D), lambda i: (i, 0))]      # text
                  + [resident(w.shape) for w in weights]),
        out_specs=pl.BlockSpec((bb, D), lambda i: (i, 0)),
        compiler_params=cparams(("parallel",)),
    )(image, text, *weights)

    # ---- kernel 3: scaled logits = (exp(logit_scale) * pred) @ normalize(target).T ----
    out = pl.pallas_call(
        _logits_kernel,
        out_shape=jax.ShapeDtypeStruct((Bp, Tp), jnp.float32),
        grid=(Bp // bb, Tp // bt),
        in_specs=[pl.BlockSpec((bb, D), lambda i, j: (i, 0)),
                  pl.BlockSpec((D, bt), lambda i, j: (0, j))],
        out_specs=pl.BlockSpec((bb, bt), lambda i, j: (i, j)),
        compiler_params=cparams(("parallel", "arbitrary")),
    )(pred, tgt_norm_t)

    return out[:B, :T].astype(jnp.float32)


# --------------------------------------------------------------------------- params
def init_params(key, clip_dim, proj_dim, hidden_dim):
    """Deterministic parameters, stored transposed (in, out) and bf16 for the MXU.

    Mapping to the PyTorch module:
      w_txt/b_txt, w_img/b_img  <- text/image_projection_layer (weight.T)
      ln1_*, ln2_*              <- layer_norm1 / layer_norm2
      w_q/w_k/w_v, b_q/b_k/b_v  <- multihead_attention.in_proj_weight/bias row blocks,
                                   each transposed to (P, P).  b_k cancels in the
                                   2-token softmax, so only the reference uses it.
      w_ao/b_ao                 <- multihead_attention.out_proj
      w_comb_a/w_comb_i/b_comb  <- combiner_layer and dynamic_scalar[0] fused column-wise
                                   (columns [:H] / [H:]) and split by input half
                                   (attn_mean rows / image_proj rows).
      w_ds2/b_ds2               <- dynamic_scalar[3] (Linear(H, 1)), kept f32.
      w_out/b_out               <- output_layer.
    """
    assert proj_dim % N_HEADS == 0
    ks = iter(jax.random.split(key, 24))

    def w(fi, fo, scale=0.05):
        return (jax.random.normal(next(ks), (fi, fo), jnp.float32) * scale).astype(jnp.bfloat16)

    def b(fo, scale=0.02):
        return jax.random.normal(next(ks), (1, fo), jnp.float32) * scale

    p = {}
    p['w_txt'] = w(clip_dim, proj_dim); p['b_txt'] = b(proj_dim)
    p['w_img'] = w(clip_dim, proj_dim); p['b_img'] = b(proj_dim)
    p['ln1_g'] = jnp.ones((1, proj_dim), jnp.float32)
    p['ln1_b'] = jnp.zeros((1, proj_dim), jnp.float32)
    p['w_q'] = w(proj_dim, proj_dim); p['b_q'] = b(proj_dim)
    p['w_k'] = w(proj_dim, proj_dim); p['b_k'] = b(proj_dim)
    p['w_v'] = w(proj_dim, proj_dim); p['b_v'] = b(proj_dim)
    p['w_ao'] = w(proj_dim, proj_dim); p['b_ao'] = b(proj_dim)
    p['w_comb_a'] = w(proj_dim, 2 * hidden_dim)
    p['w_comb_i'] = w(proj_dim, 2 * hidden_dim)
    p['b_comb'] = b(2 * hidden_dim)
    p['ln2_g'] = jnp.ones((1, hidden_dim), jnp.float32)
    p['ln2_b'] = jnp.zeros((1, hidden_dim), jnp.float32)
    p['w_ds2'] = b(hidden_dim, scale=0.05)               # (1, H) f32
    p['b_ds2'] = b(1)
    p['w_out'] = w(hidden_dim, clip_dim); p['b_out'] = b(clip_dim)
    # TODO(synk): the module initializes logit_scale = 100.0 and forward applies .exp(),
    # which overflows float32; the kernel keeps the exp() (faithful forward math) but the
    # demo stores log(100) as the raw parameter so the logits stay finite.
    p['logit_scale'] = jnp.full((1, 1), jnp.log(100.0), jnp.float32)
    return p


# --------------------------------------------------------------------------- reference
def reference_forward(image, text, target, params):
    """Pure-JAX (XLA, f32) re-implementation of Combiner.forward for validation."""
    f32 = jnp.float32
    P = params['w_q'].shape[0]
    H = params['ln2_g'].shape[1]
    HD = P // N_HEADS

    def lin(x, w, b):
        return x @ w.astype(f32) + b

    def ln(x, g, b, eps=1e-5):
        mu = x.mean(-1, keepdims=True)
        var = ((x - mu) ** 2).mean(-1, keepdims=True)
        return (x - mu) / jnp.sqrt(var + eps) * g + b

    def l2(x, eps=1e-12):
        n = jnp.sqrt(jnp.sum(x * x, axis=-1, keepdims=True))
        return x / jnp.maximum(n, eps)

    tp = ln(jax.nn.relu(lin(text, params['w_txt'], params['b_txt'])),
            params['ln1_g'], params['ln1_b'])
    ip = ln(jax.nn.relu(lin(image, params['w_img'], params['b_img'])),
            params['ln1_g'], params['ln1_b'])

    x = jnp.stack([tp, ip], axis=1)                       # (B, 2, P)
    q = lin(x, params['w_q'], params['b_q'])
    k = lin(x, params['w_k'], params['b_k'])
    v = lin(x, params['w_v'], params['b_v'])
    B = x.shape[0]

    def split_heads(t):
        return t.reshape(B, 2, N_HEADS, HD).transpose(0, 2, 1, 3)

    qh, kh, vh = split_heads(q), split_heads(k), split_heads(v)
    s = jnp.einsum('bhqd,bhkd->bhqk', qh, kh) / jnp.sqrt(float(HD))
    a = jax.nn.softmax(s, axis=-1)
    o = jnp.einsum('bhqk,bhkd->bhqd', a, vh)
    o = o.transpose(0, 2, 1, 3).reshape(B, 2, P)
    attn = lin(o, params['w_ao'], params['b_ao'])
    attn_mean = attn.mean(axis=1)

    raw = jnp.concatenate([attn_mean, ip], axis=-1)       # (B, 2P)
    Wc = jnp.concatenate([params['w_comb_a'][:, :H], params['w_comb_i'][:, :H]], axis=0)
    Wd1 = jnp.concatenate([params['w_comb_a'][:, H:], params['w_comb_i'][:, H:]], axis=0)
    comb = ln(jax.nn.relu(raw @ Wc.astype(f32) + params['b_comb'][:, :H]),
              params['ln2_g'], params['ln2_b'])
    h1 = jax.nn.relu(raw @ Wd1.astype(f32) + params['b_comb'][:, H:])
    ds = jax.nn.sigmoid(h1 @ params['w_ds2'].T + params['b_ds2'])

    out = lin(comb, params['w_out'], params['b_out']) + ds * text + (1.0 - ds) * image
    pred = l2(out)
    tgt = l2(target)
    return jnp.exp(params['logit_scale'][0, 0]) * (pred @ tgt.T)


# --------------------------------------------------------------------------- demo
if __name__ == "__main__":
    # clip_feature_dim = projection_dim = hidden_dim = 128, num_heads = 4 (module default).
    # Sizes are small but chosen so every kernel runs a multi-tile grid at the default,
    # MXU-friendly tile sizes (bb=128, bt=512): grids are (2,), (2,) and (2, 2).
    B, D, P, H, T = 256, 128, 128, 128, 1024
    key = jax.random.PRNGKey(0)
    k_img, k_txt, k_tgt, k_par = jax.random.split(key, 4)
    image = jax.random.normal(k_img, (B, D), jnp.float32)
    text = jax.random.normal(k_txt, (B, D), jnp.float32)
    target = jax.random.normal(k_tgt, (B, D), jnp.float32)
    params = init_params(k_par, D, P, H)

    logits = combiner_forward(image, text, target, params)
    logits = jax.block_until_ready(logits)

    # Validate against the pure-JAX f32 reference (bf16 compute => loose-ish tolerance).
    ref = reference_forward(image, text, target, params)
    np.testing.assert_allclose(np.asarray(logits, dtype=np.float32),
                               np.asarray(ref, dtype=np.float32),
                               rtol=3e-2, atol=1.0)
    print("KERNEL_OK")
</pallas_src>

<mosaic_0001>
module attributes {stable_mosaic.version = 11 : i64} {
  func.func @_normalize_targets_kernel(%arg0: i32, %arg1: memref<256x128xf32, #tpu.memory_space<vmem>>, %arg2: memref<256x128xbf16, #tpu.memory_space<vmem>>) attributes {dimension_semantics = [#tpu.dimension_semantics<parallel>], iteration_bounds = array<i64: 1>, scalar_prefetch = 0 : i64, scratch_operands = 0 : i64, tpu.core_type = #tpu.core_type<tc>, window_params = [{transform_indices = @transform_0, window_bounds = array<i64: 256, 128>}, {transform_indices = @transform_1, window_bounds = array<i64: 256, 128>}]} {
    %c0 = arith.constant 0 : index
    %c0_0 = arith.constant 0 : index
    %0 = vector.load %arg1[%c0, %c0_0] : memref<256x128xf32, #tpu.memory_space<vmem>>, vector<256x128xf32>
    %1 = arith.mulf %0, %0 : vector<256x128xf32>
    %cst = arith.constant dense<0.000000e+00> : vector<256xf32>
    %2 = vector.multi_reduction <add>, %1, %cst [1] : vector<256x128xf32> to vector<256xf32>
    %3 = vector.shape_cast %2 : vector<256xf32> to vector<256x1xf32>
    %cst_1 = arith.constant 1.000000e-24 : f32
    %4 = vector.broadcast %cst_1 : f32 to vector<256x1xf32>
    %5 = arith.maximumf %3, %4 : vector<256x1xf32>
    %6 = math.rsqrt %5 : vector<256x1xf32>
    %7 = vector.broadcast %6 : vector<256x1xf32> to vector<256x128xf32>
    %8 = arith.mulf %0, %7 : vector<256x128xf32>
    %9 = arith.truncf %8 : vector<256x128xf32> to vector<256x128xbf16>
    %c0_2 = arith.constant 0 : index
    %c0_3 = arith.constant 0 : index
    %10 = vector.load %arg2[%c0_2, %c0_3] : memref<256x128xbf16, #tpu.memory_space<vmem>>, vector<256x128xbf16>
    tpu.vector_store %arg2[%c0_2, %c0_3], %9 {strides = array<i32>} : memref<256x128xbf16, #tpu.memory_space<vmem>>, vector<256x128xbf16>,
    return
  }
  func.func @transform_0(%arg0: i32) -> (i32, i32) {
    %c0_i32 = arith.constant 0 : i32
    %c0_i32_0 = arith.constant 0 : i32
    return %arg0, %c0_i32 : i32, i32
  }
  func.func @transform_1(%arg0: i32) -> (i32, i32) {
    %c0_i32 = arith.constant 0 : i32
    %c0_i32_0 = arith.constant 0 : i32
    return %arg0, %c0_i32 : i32, i32
  }
}

</mosaic_0001>

<llo_original>
// kernel: tpu_custom_call.1
$region0: #{tpu_custom_call.1}
  #allocation0 [shape = 'u32[]', space=smem, size = 0x4, offset = 0x4, fixed_abs, tag = 'smem constant byte address 0x4 - core index']
  #allocation1 [shape = 'u32[144,128]{1,0:T(1,128)}', space=vmem, size = 0x12000, scoped, tag = 'internal scratch']
  %s0 = inlined_call_operand.hbm [shape: f32[256,128], index: 0, kind: input, shape index: {}]
  %s1 = inlined_call_operand.hbm [shape: bf16[256,128], index: 1, kind: output, shape index: {}]
  %s2 = sld [smem:[#allocation0]]
  $region18: #{tpu_custom_call.1} parent=0
    _
  %s4 = ssub.s32 1, %s2
  %s5 = scalar_select 0, %s4, %s2
  $region1: #{tpu_custom_call.1} parent=0
    #allocation2 [shape = 'u8[131072]{0}', space=vmem, size = 0x20000, scoped, tag = 'input window, operand 0, single buffered']
    #allocation3 [shape = 's32[1]{0}', space=sflag, size = 0x4, scoped, tag = 'scoped memory for tpu_custom_call.1']
    #allocation4 [shape = 's32[1]{0}', space=sflag, size = 0x4, scoped, tag = 'scoped memory for tpu_custom_call.1']
    #allocation5 [shape = 'u8[65536]{0}', space=vmem, size = 0x10000, scoped, tag = 'output window, operand 0, single buffered']
    %6 = vsyncpa [#allocation3], 0
    %7 = vsyncpa [#allocation4], 0
    // Predicated region
    $region2: #{tpu_custom_call.1} parent=1 // pred_check
      _
    $region3: #{tpu_custom_call.1} parent=1 // pred_check_branch
      %9 = sbr.rel (0) target = $region5
    $region4: #{tpu_custom_call.1} parent=1 // pred_region
      %s11 = ssub.s32 4096, 4096
      %12 = vsyncadd [#allocation3], %s11
      %s13 = sshll.u32 [#allocation2], 4
      %s14 = int_to_ptr.vmem [resolvable:$true] %s13
      %19 = dma.hbm_to_vmem [thread:$0]  %s0, 4096, %s14, [#allocation3], 128, 128, 8
    $region5: #{tpu_custom_call.1} parent=1 // pred_fallthru
      _
    // Predicated region
    $region6: #{tpu_custom_call.1} parent=1 // pred_check
      _
    $region7: #{tpu_custom_call.1} parent=1 // pred_check_branch
      %21 = sbr.rel (0) target = $region9
    $region8: #{tpu_custom_call.1} parent=1 // pred_region
      %22 = dma.done [#allocation3], 4096
    $region9: #{tpu_custom_call.1} parent=1 // pred_fallthru
      _
    %v23 = vld [vmem:[#allocation2] sm:$0xff]
    %v24 = vld [vmem:[#allocation2 + $0x8] sm:$0xff]
    %v25 = vld [vmem:[#allocation2 + $0x10] sm:$0xff]
    %v26 = vld [vmem:[#allocation2 + $0x18] sm:$0xff]
    %v27 = vld [vmem:[#allocation2 + $0x20] sm:$0xff]
    %v28 = vld [vmem:[#allocation2 + $0x28] sm:$0xff]
    %v29 = vld [vmem:[#allocation2 + $0x30] sm:$0xff]
    %v30 = vld [vmem:[#allocation2 + $0x38] sm:$0xff]
    %v31 = vld [vmem:[#allocation2 + $0x40] sm:$0xff]
    %v32 = vld [vmem:[#allocation2 + $0x48] sm:$0xff]
    %v33 = vld [vmem:[#allocation2 + $0x50] sm:$0xff]
    %v34 = vld [vmem:[#allocation2 + $0x58] sm:$0xff]
    %v35 = vld [vmem:[#allocation2 + $0x60] sm:$0xff]
    %v36 = vld [vmem:[#allocation2 + $0x68] sm:$0xff]
    %v37 = vld [vmem:[#allocation2 + $0x70] sm:$0xff]
    %v38 = vld [vmem:[#allocation2 + $0x78] sm:$0xff]
    %v39 = vld [vmem:[#allocation2 + $0x80] sm:$0xff]
    %v40 = vld [vmem:[#allocation2 + $0x88] sm:$0xff]
    %v41 = vld [vmem:[#allocation2 + $0x90] sm:$0xff]
    %v42 = vld [vmem:[#allocation2 + $0x98] sm:$0xff]
    %v43 = vld [vmem:[#allocation2 + $0xa0] sm:$0xff]
    %v44 = vld [vmem:[#allocation2 + $0xa8] sm:$0xff]
    %v45 = vld [vmem:[#allocation2 + $0xb0] sm:$0xff]
    %v46 = vld [vmem:[#allocation2 + $0xb8] sm:$0xff]
    %v47 = vld [vmem:[#allocation2 + $0xc0] sm:$0xff]
    %v48 = vld [vmem:[#allocation2 + $0xc8] sm:$0xff]
    %v49 = vld [vmem:[#allocation2 + $0xd0] sm:$0xff]
    %v50 = vld [vmem:[#allocation2 + $0xd8] sm:$0xff]
    %v51 = vld [vmem:[#allocation2 + $0xe0] sm:$0xff]
    %v52 = vld [vmem:[#allocation2 + $0xe8] sm:$0xff]
    %v53 = vld [vmem:[#allocation2 + $0xf0] sm:$0xff]
    %v54 = vld [vmem:[#allocation2 + $0xf8] sm:$0xff]
    %v55 = vmul.f32 %v23, %v23
    %v56 = vmul.f32 %v24, %v24
    %v57 = vmul.f32 %v25, %v25
    %v58 = vmul.f32 %v26, %v26
    %v59 = vmul.f32 %v27, %v27
    %v60 = vmul.f32 %v28, %v28
    %v61 = vmul.f32 %v29, %v29
    %v62 = vmul.f32 %v30, %v30
    %v63 = vmul.f32 %v31, %v31
    %v64 = vmul.f32 %v32, %v32
    %v65 = vmul.f32 %v33, %v33
    %v66 = vmul.f32 %v34, %v34
    %v67 = vmul.f32 %v35, %v35
    %v68 = vmul.f32 %v36, %v36
    %v69 = vmul.f32 %v37, %v37
    %v70 = vmul.f32 %v38, %v38
    %v71 = vmul.f32 %v39, %v39
    %v72 = vmul.f32 %v40, %v40
    %v73 = vmul.f32 %v41, %v41
    %v74 = vmul.f32 %v42, %v42
    %v75 = vmul.f32 %v43, %v43
    %v76 = vmul.f32 %v44, %v44
    %v77 = vmul.f32 %v45, %v45
    %v78 = vmul.f32 %v46, %v46
    %v79 = vmul.f32 %v47, %v47
    %v80 = vmul.f32 %v48, %v48
    %v81 = vmul.f32 %v49, %v49
    %v82 = vmul.f32 %v50, %v50
    %v83 = vmul.f32 %v51, %v51
    %v84 = vmul.f32 %v52, %v52
    %v85 = vmul.f32 %v53, %v53
    %v86 = vmul.f32 %v54, %v54
    %87 = vadd.xlane.f32.xlu0 %v55
    %v88 = vpop.xlane.xlu0 %87
    %89 = vadd.xlane.f32.xlu0 %v56
    %v90 = vpop.xlane.xlu0 %89
    %91 = vadd.xlane.f32.xlu0 %v57
    %v92 = vpop.xlane.xlu0 %91
    %93 = vadd.xlane.f32.xlu0 %v58
    %v94 = vpop.xlane.xlu0 %93
    %95 = vadd.xlane.f32.xlu0 %v59
    %v96 = vpop.xlane.xlu0 %95
    %97 = vadd.xlane.f32.xlu0 %v60
    %v98 = vpop.xlane.xlu0 %97
    %99 = vadd.xlane.f32.xlu0 %v61
    %v100 = vpop.xlane.xlu0 %99
    %101 = vadd.xlane.f32.xlu0 %v62
    %v102 = vpop.xlane.xlu0 %101
    %103 = vadd.xlane.f32.xlu0 %v63
    %v104 = vpop.xlane.xlu0 %103
    %105 = vadd.xlane.f32.xlu0 %v64
    %v106 = vpop.xlane.xlu0 %105
    %107 = vadd.xlane.f32.xlu0 %v65
    %v108 = vpop.xlane.xlu0 %107
    %109 = vadd.xlane.f32.xlu0 %v66
    %v110 = vpop.xlane.xlu0 %109
    %111 = vadd.xlane.f32.xlu0 %v67
    %v112 = vpop.xlane.xlu0 %111
    %113 = vadd.xlane.f32.xlu0 %v68
    %v114 = vpop.xlane.xlu0 %113
    %115 = vadd.xlane.f32.xlu0 %v69
    %v116 = vpop.xlane.xlu0 %115
    %117 = vadd.xlane.f32.xlu0 %v70
    %v118 = vpop.xlane.xlu0 %117
    %119 = vadd.xlane.f32.xlu0 %v71
    %v120 = vpop.xlane.xlu0 %119
    %121 = vadd.xlane.f32.xlu0 %v72
    %v122 = vpop.xlane.xlu0 %121
    %123 = vadd.xlane.f32.xlu0 %v73
    %v124 = vpop.xlane.xlu0 %123
    %125 = vadd.xlane.f32.xlu0 %v74
    %v126 = vpop.xlane.xlu0 %125
    %127 = vadd.xlane.f32.xlu0 %v75
    %v128 = vpop.xlane.xlu0 %127
    %129 = vadd.xlane.f32.xlu0 %v76
    %v130 = vpop.xlane.xlu0 %129
    %131 = vadd.xlane.f32.xlu0 %v77
    %v132 = vpop.xlane.xlu0 %131
    %133 = vadd.xlane.f32.xlu0 %v78
    %v134 = vpop.xlane.xlu0 %133
    %135 = vadd.xlane.f32.xlu0 %v79
    %v136 = vpop.xlane.xlu0 %135
    %137 = vadd.xlane.f32.xlu0 %v80
    %v138 = vpop.xlane.xlu0 %137
    %139 = vadd.xlane.f32.xlu0 %v81
    %v140 = vpop.xlane.xlu0 %139
    %141 = vadd.xlane.f32.xlu0 %v82
    %v142 = vpop.xlane.xlu0 %141
    %143 = vadd.xlane.f32.xlu0 %v83
    %v144 = vpop.xlane.xlu0 %143
    %145 = vadd.xlane.f32.xlu0 %v84
    %v146 = vpop.xlane.xlu0 %145
    %147 = vadd.xlane.f32.xlu0 %v85
    %v148 = vpop.xlane.xlu0 %147
    %149 = vadd.xlane.f32.xlu0 %v86
    %v150 = vpop.xlane.xlu0 %149
    %v151 = vmax.f32 %v88, 1e-24
    %v152 = vmax.f32 %v90, 1e-24
    %v153 = vmax.f32 %v92, 1e-24
    %v154 = vmax.f32 %v94, 1e-24
    %v155 = vmax.f32 %v96, 1e-24
    %v156 = vmax.f32 %v98, 1e-24
    %v157 = vmax.f32 %v100, 1e-24
    %v158 = vmax.f32 %v102, 1e-24
    %v159 = vmax.f32 %v104, 1e-24
    %v160 = vmax.f32 %v106, 1e-24
    %v161 = vmax.f32 %v108, 1e-24
    %v162 = vmax.f32 %v110, 1e-24
    %v163 = vmax.f32 %v112, 1e-24
    %v164 = vmax.f32 %v114, 1e-24
    %v165 = vmax.f32 %v116, 1e-24
    %v166 = vmax.f32 %v118, 1e-24
    %v167 = vmax.f32 %v120, 1e-24
    %v168 = vmax.f32 %v122, 1e-24
    %v169 = vmax.f32 %v124, 1e-24
    %v170 = vmax.f32 %v126, 1e-24
    %v171 = vmax.f32 %v128, 1e-24
    %v172 = vmax.f32 %v130, 1e-24
    %v173 = vmax.f32 %v132, 1e-24
    %v174 = vmax.f32 %v134, 1e-24
    %v175 = vmax.f32 %v136, 1e-24
    %v176 = vmax.f32 %v138, 1e-24
    %v177 = vmax.f32 %v140, 1e-24
    %v178 = vmax.f32 %v142, 1e-24
    %v179 = vmax.f32 %v144, 1e-24
    %v180 = vmax.f32 %v146, 1e-24
    %v181 = vmax.f32 %v148, 1e-24
    %v182 = vmax.f32 %v150, 1e-24
    %v183 = vrsqrt.pop %v151
    %v184 = vrsqrt.pop %v152
    %v185 = vrsqrt.pop %v153
    %v186 = vrsqrt.pop %v154
    %v187 = vrsqrt.pop %v155
    %v188 = vrsqrt.pop %v156
    %v189 = vrsqrt.pop %v157
    %v190 = vrsqrt.pop %v158
    %v191 = vrsqrt.pop %v159
    %v192 = vrsqrt.pop %v160
    %v193 = vrsqrt.pop %v161
    %v194 = vrsqrt.pop %v162
    %v195 = vrsqrt.pop %v163
    %v196 = vrsqrt.pop %v164
    %v197 = vrsqrt.pop %v165
    %v198 = vrsqrt.pop %v166
    %v199 = vrsqrt.pop %v167
    %v200 = vrsqrt.pop %v168
    %v201 = vrsqrt.pop %v169
    %v202 = vrsqrt.pop %v170
    %v203 = vrsqrt.pop %v171
    %v204 = vrsqrt.pop %v172
    %v205 = vrsqrt.pop %v173
    %v206 = vrsqrt.pop %v174
    %v207 = vrsqrt.pop %v175
    %v208 = vrsqrt.pop %v176
    %v209 = vrsqrt.pop %v177
    %v210 = vrsqrt.pop %v178
    %v211 = vrsqrt.pop %v179
    %v212 = vrsqrt.pop %v180
    %v213 = vrsqrt.pop %v181
    %v214 = vrsqrt.pop %v182
    %v215 = vmul.f32 %v23, %v183
    %v216 = vmul.f32 %v24, %v184
    %v217 = vmul.f32 %v25, %v185
    %v218 = vmul.f32 %v26, %v186
    %v219 = vmul.f32 %v27, %v187
    %v220 = vmul.f32 %v28, %v188
    %v221 = vmul.f32 %v29, %v189
    %v222 = vmul.f32 %v30, %v190
    %v223 = vmul.f32 %v31, %v191
    %v224 = vmul.f32 %v32, %v192
    %v225 = vmul.f32 %v33, %v193
    %v226 = vmul.f32 %v34, %v194
    %v227 = vmul.f32 %v35, %v195
    %v228 = vmul.f32 %v36, %v196
    %v229 = vmul.f32 %v37, %v197
    %v230 = vmul.f32 %v38, %v198
    %v231 = vmul.f32 %v39, %v199
    %v232 = vmul.f32 %v40, %v200
    %v233 = vmul.f32 %v41, %v201
    %v234 = vmul.f32 %v42, %v202
    %v235 = vmul.f32 %v43, %v203
    %v236 = vmul.f32 %v44, %v204
    %v237 = vmul.f32 %v45, %v205
    %v238 = vmul.f32 %v46, %v206
    %v239 = vmul.f32 %v47, %v207
    %v240 = vmul.f32 %v48, %v208
    %v241 = vmul.f32 %v49, %v209
    %v242 = vmul.f32 %v50, %v210
    %v243 = vmul.f32 %v51, %v211
    %v244 = vmul.f32 %v52, %v212
    %v245 = vmul.f32 %v53, %v213
    %v246 = vmul.f32 %v54, %v214
    %v247 = vpack.c.bf16 %v216, %v215
    %v248 = vpack.c.bf16 %v218, %v217
    %v249 = vpack.c.bf16 %v220, %v219
    %v250 = vpack.c.bf16 %v222, %v221
    %v251 = vpack.c.bf16 %v224, %v223
    %v252 = vpack.c.bf16 %v226, %v225
    %v253 = vpack.c.bf16 %v228, %v227
    %v254 = vpack.c.bf16 %v230, %v229
    %v255 = vpack.c.bf16 %v232, %v231
    %v256 = vpack.c.bf16 %v234, %v233
    %v257 = vpack.c.bf16 %v236, %v235
    %v258 = vpack.c.bf16 %v238, %v237
    %v259 = vpack.c.bf16 %v240, %v239
    %v260 = vpack.c.bf16 %v242, %v241
    %v261 = vpack.c.bf16 %v244, %v243
    %v262 = vpack.c.bf16 %v246, %v245
    %v279 = vunpack.c.l.b16 %v247
    %v280 = vunpack.c.h.b16 %v247
    %v281 = vunpack.c.l.b16 %v248
    %v282 = vunpack.c.h.b16 %v248
    %v283 = vunpack.c.l.b16 %v249
    %v284 = vunpack.c.h.b16 %v249
    %v285 = vunpack.c.l.b16 %v250
    %v286 = vunpack.c.h.b16 %v250
    %v287 = vunpack.c.l.b16 %v251
    %v288 = vunpack.c.h.b16 %v251
    %v289 = vunpack.c.l.b16 %v252
    %v290 = vunpack.c.h.b16 %v252
    %v291 = vunpack.c.l.b16 %v253
    %v292 = vunpack.c.h.b16 %v253
    %v293 = vunpack.c.l.b16 %v254
    %v294 = vunpack.c.h.b16 %v254
    %v295 = vunpack.c.l.b16 %v255
    %v296 = vunpack.c.h.b16 %v255
    %v297 = vunpack.c.l.b16 %v256
    %v298 = vunpack.c.h.b16 %v256
    %v299 = vunpack.c.l.b16 %v257
    %v300 = vunpack.c.h.b16 %v257
    %v301 = vunpack.c.l.b16 %v258
    %v302 = vunpack.c.h.b16 %v258
    %v303 = vunpack.c.l.b16 %v259
    %v304 = vunpack.c.h.b16 %v259
    %v305 = vunpack.c.l.b16 %v260
    %v306 = vunpack.c.h.b16 %v260
    %v307 = vunpack.c.l.b16 %v261
    %v308 = vunpack.c.h.b16 %v261
    %v309 = vunpack.c.l.b16 %v262
    %v310 = vunpack.c.h.b16 %v262
    %v311 = vpack.c.b16 %v279, %v279
    %v312 = vpack.c.b16 %v280, %v280
    %v313 = vpack.c.b16 %v281, %v281
    %v314 = vpack.c.b16 %v282, %v282
    %v315 = vpack.c.b16 %v283, %v283
    %v316 = vpack.c.b16 %v284, %v284
    %v317 = vpack.c.b16 %v285, %v285
    %v318 = vpack.c.b16 %v286, %v286
    %v319 = vpack.c.b16 %v287, %v287
    %v320 = vpack.c.b16 %v288, %v288
    %v321 = vpack.c.b16 %v289, %v289
    %v322 = vpack.c.b16 %v290, %v290
    %v323 = vpack.c.b16 %v291, %v291
    %v324 = vpack.c.b16 %v292, %v292
    %v325 = vpack.c.b16 %v293, %v293
    %v326 = vpack.c.b16 %v294, %v294
    %v327 = vpack.c.b16 %v295, %v295
    %v328 = vpack.c.b16 %v296, %v296
    %v329 = vpack.c.b16 %v297, %v297
    %v330 = vpack.c.b16 %v298, %v298
    %v331 = vpack.c.b16 %v299, %v299
    %v332 = vpack.c.b16 %v300, %v300
    %v333 = vpack.c.b16 %v301, %v301
    %v334 = vpack.c.b16 %v302, %v302
    %v335 = vpack.c.b16 %v303, %v303
    %v336 = vpack.c.b16 %v304, %v304
    %v337 = vpack.c.b16 %v305, %v305
    %v338 = vpack.c.b16 %v306, %v306
    %v339 = vpack.c.b16 %v307, %v307
    %v340 = vpack.c.b16 %v308, %v308
    %v341 = vpack.c.b16 %v309, %v309
    %v342 = vpack.c.b16 %v310, %v310
    %375 = vst [vmem:[#allocation5] sm:$0xf] %v311
    %376 = vst [vmem:[#allocation5 + $0x4] sm:$0xf] %v312
    %377 = vst [vmem:[#allocation5 + $0x8] sm:$0xf] %v313
    %378 = vst [vmem:[#allocation5 + $0xc] sm:$0xf] %v314
    %379 = vst [vmem:[#allocation5 + $0x10] sm:$0xf] %v315
    %380 = vst [vmem:[#allocation5 + $0x14] sm:$0xf] %v316
    %381 = vst [vmem:[#allocation5 + $0x18] sm:$0xf] %v317
    %382 = vst [vmem:[#allocation5 + $0x1c] sm:$0xf] %v318
    %383 = vst [vmem:[#allocation5 + $0x20] sm:$0xf] %v319
    %384 = vst [vmem:[#allocation5 + $0x24] sm:$0xf] %v320
    %385 = vst [vmem:[#allocation5 + $0x28] sm:$0xf] %v321
    %386 = vst [vmem:[#allocation5 + $0x2c] sm:$0xf] %v322
    %387 = vst [vmem:[#allocation5 + $0x30] sm:$0xf] %v323
    %388 = vst [vmem:[#allocation5 + $0x34] sm:$0xf] %v324
    %389 = vst [vmem:[#allocation5 + $0x38] sm:$0xf] %v325
    %390 = vst [vmem:[#allocation5 + $0x3c] sm:$0xf] %v326
    %391 = vst [vmem:[#allocation5 + $0x40] sm:$0xf] %v327
    %392 = vst [vmem:[#allocation5 + $0x44] sm:$0xf] %v328
    %393 = vst [vmem:[#allocation5 + $0x48] sm:$0xf] %v329
    %394 = vst [vmem:[#allocation5 + $0x4c] sm:$0xf] %v330
    %395 = vst [vmem:[#allocation5 + $0x50] sm:$0xf] %v331
    %396 = vst [vmem:[#allocation5 + $0x54] sm:$0xf] %v332
    %397 = vst [vmem:[#allocation5 + $0x58] sm:$0xf] %v333
    %398 = vst [vmem:[#allocation5 + $0x5c] sm:$0xf] %v334
    %399 = vst [vmem:[#allocation5 + $0x60] sm:$0xf] %v335
    %400 = vst [vmem:[#allocation5 + $0x64] sm:$0xf] %v336
    %401 = vst [vmem:[#allocation5 + $0x68] sm:$0xf] %v337
    %402 = vst [vmem:[#allocation5 + $0x6c] sm:$0xf] %v338
    %403 = vst [vmem:[#allocation5 + $0x70] sm:$0xf] %v339
    %404 = vst [vmem:[#allocation5 + $0x74] sm:$0xf] %v340
    %405 = vst [vmem:[#allocation5 + $0x78] sm:$0xf] %v341
    %406 = vst [vmem:[#allocation5 + $0x7c] sm:$0xf] %v342
    // Predicated region
    $region10: #{tpu_custom_call.1} parent=1 // pred_check
      _
    $region11: #{tpu_custom_call.1} parent=1 // pred_check_branch
      %408 = sbr.rel (0) target = $region13
    $region12: #{tpu_custom_call.1} parent=1 // pred_region
      %s410 = ssub.s32 2048, 2048
      %411 = vsyncadd [#allocation4], %s410
      %s412 = sshll.u32 [#allocation5], 4
      %s413 = int_to_ptr.vmem [resolvable:$true] %s412
      %418 = dma.vmem_to_hbm [thread:$0]  %s413, 2048, %s1, [#allocation4], 64, 64, 4
    $region13: #{tpu_custom_call.1} parent=1 // pred_fallthru
      _
    // Predicated region
    $region14: #{tpu_custom_call.1} parent=1 // pred_check
      _
    $region15: #{tpu_custom_call.1} parent=1 // pred_check_branch
      %420 = sbr.rel (0) target = $region17
    $region16: #{tpu_custom_call.1} parent=1 // pred_region
      %421 = dma.done [#allocation4], 2048
    $region17: #{tpu_custom_call.1} parent=1 // pred_fallthru
      _
    %422 = vsyncpa [#allocation3], 1
    %423 = vsyncpa [#allocation4], 1

</llo_original>
